<compile_context>
chip_gen: v7x
topology: tpu7x:2x2x1
jax: 0.10.0
libtpu: 0.0.40
codegen_flags: <defaults>
</compile_context>

<pallas_src>
import functools

import numpy as np
import jax
import jax.numpy as jnp
from jax.experimental import pallas as pl
from jax.experimental.pallas import tpu as pltpu


_TM_CAP = 256                           # row-tile cap (leading "batch" block dim)
_TN_CAP = 8192                          # lane-tile cap (multiple of 128)
_VMEM_LIVE_BUDGET = 32 * 1024 * 1024    # target live (2x in + 2x out) VMEM bytes
_VMEM_LIMIT_BYTES = 48 * 1024 * 1024    # scoped-VMEM request (ok on v5e/v6e/v7x)
_MIN_KERNEL_ELEMS = 1 << 15             # below this, let XLA fuse the JAX path


def _cfo_kernel(x_ref, cos_ref, sin_ref, o_ref):
    """Complex rotation on one (TM, 2, TN) tile.

    x_ref   : VMEM (TM, 2, TN) input, original dtype (IQ on the middle axis)
    cos_ref : VMEM (1, TN) float32 rotation table
    sin_ref : VMEM (1, TN) float32 rotation table
    o_ref   : VMEM (TM, 2, TN) output, original dtype
    """
    a = x_ref[:, 0, :].astype(jnp.float32)
    b = x_ref[:, 1, :].astype(jnp.float32)
    # Broadcast once per tile and reuse (JAX does not CSE broadcast_in_dim).
    cos = jnp.broadcast_to(cos_ref[...], a.shape)
    sin = jnp.broadcast_to(sin_ref[...], a.shape)
    o_ref[:, 0, :] = (a * cos - b * sin).astype(o_ref.dtype)
    o_ref[:, 1, :] = (a * sin + b * cos).astype(o_ref.dtype)


@functools.lru_cache(maxsize=32)
def _cfo_tables(cfo: float, n: int):
    """cos/sin rotation tables, cached per (cfo, N).

    Phase is reduced mod 1 in float64 so long records keep full mantissa
    accuracy before the float32 cast; host cos/sin + H2D happen once per
    (cfo, N) rather than every call.
    """
    t = np.arange(n, dtype=np.float64)
    phase = 2.0 * np.pi * np.mod(t * float(cfo), 1.0)
    cos = jnp.asarray(np.cos(phase), dtype=jnp.float32).reshape(1, n)
    sin = jnp.asarray(np.sin(phase), dtype=jnp.float32).reshape(1, n)
    return cos, sin


def _cfo_reference(x: jnp.ndarray, cfo: float) -> jnp.ndarray:
    """Pure-JAX reference mirroring the PyTorch forward (f64-accurate phase)."""
    if cfo == 0.0:
        return x
    N = x.shape[3]
    t = np.arange(N, dtype=np.float64)
    phase = 2.0 * np.pi * np.mod(t * float(cfo), 1.0)
    cos = jnp.asarray(np.cos(phase), dtype=x.dtype)
    sin = jnp.asarray(np.sin(phase), dtype=x.dtype)
    a = x[:, :, 0:1, :]
    b = x[:, :, 1:2, :]
    return jnp.concatenate((a * cos - b * sin, a * sin + b * cos), axis=2)


def cfo_forward(x: jnp.ndarray, cfo: float, *, force_kernel: bool = False) -> jnp.ndarray:
    """CFO channel model forward pass. x: [B, C, 2, N]."""
    cfo = float(cfo)  # static Python float, matching the PyTorch module attribute
    if abs(cfo) > 0.5:
        raise ValueError(
            "The center frequency offset must be between -0.5 and 0.5 of the sample rate"
        )
    if cfo == 0.0:
        return x

    B, C, IQ, N = x.shape
    assert IQ == 2, "IQ dimension must be 2"
    M = B * C

    # float64 inputs keep full precision on the plain-JAX path (the kernel
    # computes in f32); tiny problems skip the pallas_call launch overhead.
    if x.dtype == jnp.float64:
        return _cfo_reference(x, cfo)
    if not force_kernel and (M * N) < _MIN_KERNEL_ELEMS:
        return _cfo_reference(x, cfo)

    # Contiguous, copy-free reshape: (B, C, 2, N) -> (M, 2, N).
    x2 = x.reshape(M, 2, N)

    # Tile sizes.  The leading row dim has no layout constraint; the last two
    # block dims are (2, TN): "2" equals the full IQ extent, TN is a multiple
    # of 128 (or N itself when N < 128).  Each (TM, 2, TN) block occupies
    # ~TM*32*TN bytes of VMEM (IQ padded to a sublane group) for f32/bf16, and
    # we hold 2 input + 2 output buffers -> size TN from the live budget.
    TM = min(M, _TM_CAP)
    if N >= 128:
        tn_budget = max(128, (_VMEM_LIVE_BUDGET // (4 * TM * 32)) // 128 * 128)
        TN = min(tn_budget, _TN_CAP, (N // 128) * 128)
    else:
        TN = N

    grid = (pl.cdiv(M, TM), pl.cdiv(N, TN))
    xo_spec = pl.BlockSpec((TM, 2, TN), lambda i, j: (i, 0, j))
    tab_spec = pl.BlockSpec((1, TN), lambda i, j: (0, j))

    cos_tab, sin_tab = _cfo_tables(cfo, N)

    itemsize = jnp.dtype(x.dtype).itemsize
    cost = pl.CostEstimate(
        flops=6 * M * N,                                   # 4 mul + 2 add per sample
        transcendentals=0,
        bytes_accessed=2 * (2 * M * N * itemsize) + 2 * N * 4,
    )

    out = pl.pallas_call(
        _cfo_kernel,
        out_shape=jax.ShapeDtypeStruct((M, 2, N), x.dtype),
        grid=grid,
        in_specs=[xo_spec, tab_spec, tab_spec],
        out_specs=xo_spec,
        compiler_params=pltpu.CompilerParams(
            dimension_semantics=("parallel", "parallel"),
            vmem_limit_bytes=_VMEM_LIMIT_BYTES,
        ),
        cost_estimate=cost,
    )(x2, cos_tab, sin_tab)

    return out.reshape(B, C, 2, N)


if __name__ == "__main__":
    key = jax.random.PRNGKey(0)
    cfo = 0.1  # normalized center frequency offset

    # Primary small shape: M = B*C = 6 exercises a non-multiple-of-8 row tile.
    B, C, IQ, N = 3, 2, 2, 384
    x = jax.random.normal(key, (B, C, IQ, N), dtype=jnp.float32)
    y = jax.block_until_ready(cfo_forward(x, cfo, force_kernel=True))
    np.testing.assert_allclose(
        np.asarray(y), np.asarray(_cfo_reference(x, cfo)), rtol=1e-5, atol=1e-5
    )

    # Ragged N (not a multiple of 128) exercises the partial boundary block.
    x2 = jax.random.normal(jax.random.PRNGKey(1), (2, 2, 2, 200), dtype=jnp.float32)
    y2 = jax.block_until_ready(cfo_forward(x2, cfo, force_kernel=True))
    np.testing.assert_allclose(
        np.asarray(y2), np.asarray(_cfo_reference(x2, cfo)), rtol=1e-5, atol=1e-5
    )

    print("KERNEL_OK")
</pallas_src>

<mosaic_0001>
module attributes {stable_mosaic.version = 11 : i64} {
  func.func @_cfo_kernel(%arg0: i32, %arg1: i32, %arg2: memref<6x2x384xf32, #tpu.memory_space<vmem>>, %arg3: memref<1x384xf32, #tpu.memory_space<vmem>>, %arg4: memref<1x384xf32, #tpu.memory_space<vmem>>, %arg5: memref<6x2x384xf32, #tpu.memory_space<vmem>>) attributes {dimension_semantics = [#tpu.dimension_semantics<parallel>, #tpu.dimension_semantics<parallel>], iteration_bounds = array<i64: 1, 1>, scalar_prefetch = 0 : i64, scratch_operands = 0 : i64, tpu.core_type = #tpu.core_type<tc>, window_params = [{transform_indices = @transform_0, window_bounds = array<i64: 6, 2, 384>}, {transform_indices = @transform_1, window_bounds = array<i64: 1, 384>}, {transform_indices = @transform_2, window_bounds = array<i64: 1, 384>}, {transform_indices = @transform_3, window_bounds = array<i64: 6, 2, 384>}]} {
    %c0 = arith.constant 0 : index
    %c0_0 = arith.constant 0 : index
    %c0_1 = arith.constant 0 : index
    %0 = vector.load %arg2[%c0, %c0_0, %c0_1] : memref<6x2x384xf32, #tpu.memory_space<vmem>>, vector<6x1x384xf32>
    %1 = vector.shape_cast %0 : vector<6x1x384xf32> to vector<6x384xf32>
    %c0_2 = arith.constant 0 : index
    %c1 = arith.constant 1 : index
    %c0_3 = arith.constant 0 : index
    %2 = vector.load %arg2[%c0_2, %c1, %c0_3] : memref<6x2x384xf32, #tpu.memory_space<vmem>>, vector<6x1x384xf32>
    %3 = vector.shape_cast %2 : vector<6x1x384xf32> to vector<6x384xf32>
    %c0_4 = arith.constant 0 : index
    %c0_5 = arith.constant 0 : index
    %4 = vector.load %arg3[%c0_4, %c0_5] : memref<1x384xf32, #tpu.memory_space<vmem>>, vector<1x384xf32>
    %5 = vector.shape_cast %4 : vector<1x384xf32> to vector<1x384xf32>
    %6 = vector.broadcast %5 : vector<1x384xf32> to vector<6x384xf32>
    %c0_6 = arith.constant 0 : index
    %c0_7 = arith.constant 0 : index
    %7 = vector.load %arg4[%c0_6, %c0_7] : memref<1x384xf32, #tpu.memory_space<vmem>>, vector<1x384xf32>
    %8 = vector.shape_cast %7 : vector<1x384xf32> to vector<1x384xf32>
    %9 = vector.broadcast %8 : vector<1x384xf32> to vector<6x384xf32>
    %10 = arith.mulf %1, %6 : vector<6x384xf32>
    %11 = arith.mulf %3, %9 : vector<6x384xf32>
    %12 = arith.subf %10, %11 : vector<6x384xf32>
    %c0_8 = arith.constant 0 : index
    %c0_9 = arith.constant 0 : index
    %c0_10 = arith.constant 0 : index
    %13 = vector.load %arg5[%c0_8, %c0_9, %c0_10] : memref<6x2x384xf32, #tpu.memory_space<vmem>>, vector<6x1x384xf32>
    %14 = vector.shape_cast %13 : vector<6x1x384xf32> to vector<6x384xf32>
    %15 = vector.shape_cast %12 : vector<6x384xf32> to vector<6x1x384xf32>
    tpu.vector_store %arg5[%c0_8, %c0_9, %c0_10], %15 {strides = array<i32>} : memref<6x2x384xf32, #tpu.memory_space<vmem>>, vector<6x1x384xf32>,
    %16 = arith.mulf %1, %9 : vector<6x384xf32>
    %17 = arith.mulf %3, %6 : vector<6x384xf32>
    %18 = arith.addf %16, %17 : vector<6x384xf32>
    %c0_11 = arith.constant 0 : index
    %c1_12 = arith.constant 1 : index
    %c0_13 = arith.constant 0 : index
    %19 = vector.load %arg5[%c0_11, %c1_12, %c0_13] : memref<6x2x384xf32, #tpu.memory_space<vmem>>, vector<6x1x384xf32>
    %20 = vector.shape_cast %19 : vector<6x1x384xf32> to vector<6x384xf32>
    %21 = vector.shape_cast %18 : vector<6x384xf32> to vector<6x1x384xf32>
    tpu.vector_store %arg5[%c0_11, %c1_12, %c0_13], %21 {strides = array<i32>} : memref<6x2x384xf32, #tpu.memory_space<vmem>>, vector<6x1x384xf32>,
    return
  }
  func.func @transform_0(%arg0: i32, %arg1: i32) -> (i32, i32, i32) {
    %c0_i32 = arith.constant 0 : i32
    %c0_i32_0 = arith.constant 0 : i32
    return %arg0, %c0_i32, %arg1 : i32, i32, i32
  }
  func.func @transform_1(%arg0: i32, %arg1: i32) -> (i32, i32) {
    %c0_i32 = arith.constant 0 : i32
    %c0_i32_0 = arith.constant 0 : i32
    return %c0_i32, %arg1 : i32, i32
  }
  func.func @transform_2(%arg0: i32, %arg1: i32) -> (i32, i32) {
    %c0_i32 = arith.constant 0 : i32
    %c0_i32_0 = arith.constant 0 : i32
    return %c0_i32, %arg1 : i32, i32
  }
  func.func @transform_3(%arg0: i32, %arg1: i32) -> (i32, i32, i32) {
    %c0_i32 = arith.constant 0 : i32
    %c0_i32_0 = arith.constant 0 : i32
    return %arg0, %c0_i32, %arg1 : i32, i32, i32
  }
}

</mosaic_0001>

<llo_original>
// kernel: tpu_custom_call.1
$region0: #{tpu_custom_call.1}
  #allocation0 [shape = 'u32[]', space=smem, size = 0x4, offset = 0x4, fixed_abs, tag = 'smem constant byte address 0x4 - core index']
  #allocation1 [shape = 'u32[144,128]{1,0:T(1,128)}', space=vmem, size = 0x12000, scoped, tag = 'internal scratch']
  %s0 = inlined_call_operand.hbm [shape: f32[6,2,384], index: 0, kind: input, shape index: {}]
  %s1 = inlined_call_operand.vmem [shape: f32[1,384], index: 1, kind: input, shape index: {}]
  %s2 = inlined_call_operand.vmem [shape: f32[1,384], index: 2, kind: input, shape index: {}]
  %s3 = inlined_call_operand.hbm [shape: f32[6,2,384], index: 3, kind: output, shape index: {}]
  %s4 = sld [smem:[#allocation0]]
  $region26: #{tpu_custom_call.1} parent=0
    _
  %s6 = ssub.s32 1, %s4
  %s7 = scalar_select 0, %s6, %s4
  $region1: #{tpu_custom_call.1} parent=0
    #allocation2 [shape = 'u8[18432]{0}', space=vmem, size = 0x4800, scoped, tag = 'input window, operand 0, single buffered']
    #allocation3 [shape = 's32[1]{0}', space=sflag, size = 0x4, scoped, tag = 'scoped memory for tpu_custom_call.1']
    #allocation4 [shape = 's32[1]{0}', space=sflag, size = 0x4, scoped, tag = 'scoped memory for tpu_custom_call.1']
    #allocation5 [shape = 'u8[18432]{0}', space=vmem, size = 0x4800, scoped, tag = 'output window, operand 0, single buffered']
    %8 = vsyncpa [#allocation3], 0
    %9 = vsyncpa [#allocation4], 0
    // Predicated region
    $region2: #{tpu_custom_call.1} parent=1 // pred_check
      _
    $region3: #{tpu_custom_call.1} parent=1 // pred_check_branch
      %11 = sbr.rel (0) target = $region5
    $region4: #{tpu_custom_call.1} parent=1 // pred_region
      %s13 = ssub.s32 576, 576
      %14 = vsyncadd [#allocation3], %s13
      %s15 = sshll.u32 [#allocation2], 4
      %s16 = int_to_ptr.vmem [resolvable:$true] %s15
      %21 = dma.hbm_to_vmem [thread:$0]  %s0, 576, %s16, [#allocation3], 96, 96, 6
    $region5: #{tpu_custom_call.1} parent=1 // pred_fallthru
      _
    // Predicated region
    $region6: #{tpu_custom_call.1} parent=1 // pred_check
      _
    $region7: #{tpu_custom_call.1} parent=1 // pred_check_branch
      %23 = sbr.rel (0) target = $region9
    $region8: #{tpu_custom_call.1} parent=1 // pred_region
      _
    $region9: #{tpu_custom_call.1} parent=1 // pred_fallthru
      _
    // Predicated region
    $region10: #{tpu_custom_call.1} parent=1 // pred_check
      _
    $region11: #{tpu_custom_call.1} parent=1 // pred_check_branch
      %25 = sbr.rel (0) target = $region13
    $region12: #{tpu_custom_call.1} parent=1 // pred_region
      _
    $region13: #{tpu_custom_call.1} parent=1 // pred_fallthru
      _
    // Predicated region
    $region14: #{tpu_custom_call.1} parent=1 // pred_check
      _
    $region15: #{tpu_custom_call.1} parent=1 // pred_check_branch
      %27 = sbr.rel (0) target = $region17
    $region16: #{tpu_custom_call.1} parent=1 // pred_region
      %28 = dma.done [#allocation3], 576
    $region17: #{tpu_custom_call.1} parent=1 // pred_fallthru
      _
    %v29 = vld [vmem:[#allocation2] ss:$2 sm:$0x7]
    %s30 = scalar_lea.vmem [#allocation2], 6
    %v31 = vld [vmem:[%s30] ss:$2 sm:$0x7]
    %s32 = scalar_lea.vmem [#allocation2], 12
    %v33 = vld [vmem:[%s32] ss:$2 sm:$0x7]
    %s34 = scalar_lea.vmem [#allocation2], 18
    %v35 = vld [vmem:[%s34] ss:$2 sm:$0x7]
    %s36 = scalar_lea.vmem [#allocation2], 24
    %v37 = vld [vmem:[%s36] ss:$2 sm:$0x7]
    %s38 = scalar_lea.vmem [#allocation2], 30
    %v39 = vld [vmem:[%s38] ss:$2 sm:$0x7]
    %s40 = scalar_lea.vmem [#allocation2], 1
    %v41 = vld [vmem:[%s40] ss:$2 sm:$0x7]
    %s42 = scalar_lea.vmem [#allocation2], 7
    %v43 = vld [vmem:[%s42] ss:$2 sm:$0x7]
    %s44 = scalar_lea.vmem [#allocation2], 13
    %v45 = vld [vmem:[%s44] ss:$2 sm:$0x7]
    %s46 = scalar_lea.vmem [#allocation2], 19
    %v47 = vld [vmem:[%s46] ss:$2 sm:$0x7]
    %s48 = scalar_lea.vmem [#allocation2], 25
    %v49 = vld [vmem:[%s48] ss:$2 sm:$0x7]
    %s50 = scalar_lea.vmem [#allocation2], 31
    %v51 = vld [vmem:[%s50] ss:$2 sm:$0x7]
    %v52 = vld [vmem:[%s1] sm:$0x7]
    %v54 = vlaneseq
    %v55 = vshrl.u32 %v54, 7
    %v56 = vsub.s32 0, %v55
    %v57 = vrot.slane %v52, %v56
    %v58 = vlaneseq
    %v59 = vshrl.u32 %v58, 7
    %v60 = vsub.s32 1, %v59
    %v61 = vrot.slane %v52, %v60
    %v62 = vlaneseq
    %v63 = vshrl.u32 %v62, 7
    %v64 = vsub.s32 2, %v63
    %v65 = vrot.slane %v52, %v64
    %v66 = vld [vmem:[%s2] sm:$0x7]
    %v68 = vlaneseq
    %v69 = vshrl.u32 %v68, 7
    %v70 = vsub.s32 0, %v69
    %v71 = vrot.slane %v66, %v70
    %v72 = vlaneseq
    %v73 = vshrl.u32 %v72, 7
    %v74 = vsub.s32 1, %v73
    %v75 = vrot.slane %v66, %v74
    %v76 = vlaneseq
    %v77 = vshrl.u32 %v76, 7
    %v78 = vsub.s32 2, %v77
    %v79 = vrot.slane %v66, %v78
    %v80 = vcombine.low %v57, %v61
    %v81 = vcombine.high %v57, %v61
    %v82 = vcombine.high %v65, %v65
    %v84 = vunpack.c.l.s4 1966171168
    %v85 = vunpack.c.0.s8 %v84
    %v86 = vlaneseq
    %v87 = vshrl.u32 %v86, 7
    %v88 = vsub.s32 %v85, %v87
    %v89 = vrot.slane %v80, %v88
    %v91 = vunpack.c.l.s4 1966171168
    %v92 = vunpack.c.0.s8 %v91
    %v93 = vlaneseq
    %v94 = vshrl.u32 %v93, 7
    %v95 = vsub.s32 %v92, %v94
    %v96 = vrot.slane %v81, %v95
    %v98 = vunpack.c.l.s4 1966171168
    %v99 = vunpack.c.0.s8 %v98
    %v100 = vlaneseq
    %v101 = vshrl.u32 %v100, 7
    %v102 = vsub.s32 %v99, %v101
    %v103 = vrot.slane %v65, %v102
    %v105 = vunpack.c.l.s4 1966171168
    %v106 = vunpack.c.0.s8 %v105
    %v107 = vlaneseq
    %v108 = vshrl.u32 %v107, 7
    %v109 = vsub.s32 %v106, %v108
    %v110 = vrot.slane %v82, %v109
    %v111 = vcombine.low %v89, %v103
    %v112 = vcombine.high %v89, %v103
    %v113 = vcombine.low %v96, %v110
    %v114 = vcombine.high %v96, %v110
    %v116 = vunpack.c.l.s4 1966171168
    %v117 = vunpack.c.0.s8 %v116
    %v118 = vlaneseq
    %v119 = vshrl.u32 %v118, 7
    %v120 = vsub.s32 %v117, %v119
    %v121 = vrot.slane %v111, %v120
    %v123 = vunpack.c.l.s4 1966171168
    %v124 = vunpack.c.0.s8 %v123
    %v125 = vlaneseq
    %v126 = vshrl.u32 %v125, 7
    %v127 = vsub.s32 %v124, %v126
    %v128 = vrot.slane %v113, %v127
    %v130 = vunpack.c.l.s4 1966171168
    %v131 = vunpack.c.0.s8 %v130
    %v132 = vlaneseq
    %v133 = vshrl.u32 %v132, 7
    %v134 = vsub.s32 %v131, %v133
    %v135 = vrot.slane %v112, %v134
    %v137 = vunpack.c.l.s4 1966171168
    %v138 = vunpack.c.0.s8 %v137
    %v139 = vlaneseq
    %v140 = vshrl.u32 %v139, 7
    %v141 = vsub.s32 %v138, %v140
    %v142 = vrot.slane %v114, %v141
    %v143 = vcombine.high %v121, %v121
    %v144 = vcombine.high %v135, %v135
    %v151 = vmul.f32 %v29, %v121
    %v152 = vmul.f32 %v31, %v135
    %v153 = vmul.f32 %v33, %v143
    %v154 = vmul.f32 %v35, %v144
    %v155 = vmul.f32 %v37, %v128
    %v156 = vmul.f32 %v39, %v142
    %v157 = vcombine.low %v71, %v75
    %v158 = vcombine.high %v71, %v75
    %v159 = vcombine.high %v79, %v79
    %v161 = vunpack.c.l.s4 1966171168
    %v162 = vunpack.c.0.s8 %v161
    %v163 = vlaneseq
    %v164 = vshrl.u32 %v163, 7
    %v165 = vsub.s32 %v162, %v164
    %v166 = vrot.slane %v157, %v165
    %v168 = vunpack.c.l.s4 1966171168
    %v169 = vunpack.c.0.s8 %v168
    %v170 = vlaneseq
    %v171 = vshrl.u32 %v170, 7
    %v172 = vsub.s32 %v169, %v171
    %v173 = vrot.slane %v158, %v172
    %v175 = vunpack.c.l.s4 1966171168
    %v176 = vunpack.c.0.s8 %v175
    %v177 = vlaneseq
    %v178 = vshrl.u32 %v177, 7
    %v179 = vsub.s32 %v176, %v178
    %v180 = vrot.slane %v79, %v179
    %v182 = vunpack.c.l.s4 1966171168
    %v183 = vunpack.c.0.s8 %v182
    %v184 = vlaneseq
    %v185 = vshrl.u32 %v184, 7
    %v186 = vsub.s32 %v183, %v185
    %v187 = vrot.slane %v159, %v186
    %v188 = vcombine.low %v166, %v180
    %v189 = vcombine.high %v166, %v180
    %v190 = vcombine.low %v173, %v187
    %v191 = vcombine.high %v173, %v187
    %v193 = vunpack.c.l.s4 1966171168
    %v194 = vunpack.c.0.s8 %v193
    %v195 = vlaneseq
    %v196 = vshrl.u32 %v195, 7
    %v197 = vsub.s32 %v194, %v196
    %v198 = vrot.slane %v188, %v197
    %v200 = vunpack.c.l.s4 1966171168
    %v201 = vunpack.c.0.s8 %v200
    %v202 = vlaneseq
    %v203 = vshrl.u32 %v202, 7
    %v204 = vsub.s32 %v201, %v203
    %v205 = vrot.slane %v190, %v204
    %v207 = vunpack.c.l.s4 1966171168
    %v208 = vunpack.c.0.s8 %v207
    %v209 = vlaneseq
    %v210 = vshrl.u32 %v209, 7
    %v211 = vsub.s32 %v208, %v210
    %v212 = vrot.slane %v189, %v211
    %v214 = vunpack.c.l.s4 1966171168
    %v215 = vunpack.c.0.s8 %v214
    %v216 = vlaneseq
    %v217 = vshrl.u32 %v216, 7
    %v218 = vsub.s32 %v215, %v217
    %v219 = vrot.slane %v191, %v218
    %v220 = vcombine.high %v198, %v198
    %v221 = vcombine.high %v212, %v212
    %v228 = vmul.f32 %v41, %v198
    %v229 = vmul.f32 %v43, %v212
    %v230 = vmul.f32 %v45, %v220
    %v231 = vmul.f32 %v47, %v221
    %v232 = vmul.f32 %v49, %v205
    %v233 = vmul.f32 %v51, %v219
    %v234 = vsub.f32 %v151, %v228
    %v235 = vsub.f32 %v152, %v229
    %v236 = vsub.f32 %v153, %v230
    %v237 = vsub.f32 %v154, %v231
    %v238 = vsub.f32 %v155, %v232
    %v239 = vsub.f32 %v156, %v233
    %v240 = vlaneseq
    %vm241 = vcmp.ge.s32.totalorder %v240, 0
    %vm242 = vcmp.lt.s32.totalorder %v240, 384
    %vm243 = vmand %vm241, %vm242
    %244 = vst.msk [vmem:[#allocation5] ss:$2 sm:$0x7] %vm243, %v234
    %s245 = scalar_lea.vmem [#allocation5], 6
    %246 = vst.msk [vmem:[%s245] ss:$2 sm:$0x7] %vm243, %v235
    %s247 = scalar_lea.vmem [#allocation5], 12
    %248 = vst.msk [vmem:[%s247] ss:$2 sm:$0x7] %vm243, %v236
    %s249 = scalar_lea.vmem [#allocation5], 18
    %250 = vst.msk [vmem:[%s249] ss:$2 sm:$0x7] %vm243, %v237
    %s251 = scalar_lea.vmem [#allocation5], 24
    %252 = vst.msk [vmem:[%s251] ss:$2 sm:$0x7] %vm243, %v238
    %s253 = scalar_lea.vmem [#allocation5], 30
    %254 = vst.msk [vmem:[%s253] ss:$2 sm:$0x7] %vm243, %v239
    %v255 = vmul.f32 %v29, %v198
    %v256 = vmul.f32 %v31, %v212
    %v257 = vmul.f32 %v33, %v220
    %v258 = vmul.f32 %v35, %v221
    %v259 = vmul.f32 %v37, %v205
    %v260 = vmul.f32 %v39, %v219
    %v261 = vmul.f32 %v41, %v121
    %v262 = vmul.f32 %v43, %v135
    %v263 = vmul.f32 %v45, %v143
    %v264 = vmul.f32 %v47, %v144
    %v265 = vmul.f32 %v49, %v128
    %v266 = vmul.f32 %v51, %v142
    %v267 = vadd.f32 %v255, %v261
    %v268 = vadd.f32 %v256, %v262
    %v269 = vadd.f32 %v257, %v263
    %v270 = vadd.f32 %v258, %v264
    %v271 = vadd.f32 %v259, %v265
    %v272 = vadd.f32 %v260, %v266
    %s273 = scalar_lea.vmem [#allocation5], 1
    %274 = vst.msk [vmem:[%s273] ss:$2 sm:$0x7] %vm243, %v267
    %s275 = scalar_lea.vmem [#allocation5], 7
    %276 = vst.msk [vmem:[%s275] ss:$2 sm:$0x7] %vm243, %v268
    %s277 = scalar_lea.vmem [#allocation5], 13
    %278 = vst.msk [vmem:[%s277] ss:$2 sm:$0x7] %vm243, %v269
    %s279 = scalar_lea.vmem [#allocation5], 19
    %280 = vst.msk [vmem:[%s279] ss:$2 sm:$0x7] %vm243, %v270
    %s281 = scalar_lea.vmem [#allocation5], 25
    %282 = vst.msk [vmem:[%s281] ss:$2 sm:$0x7] %vm243, %v271
    %s283 = scalar_lea.vmem [#allocation5], 31
    %284 = vst.msk [vmem:[%s283] ss:$2 sm:$0x7] %vm243, %v272
    // Predicated region
    $region18: #{tpu_custom_call.1} parent=1 // pred_check
      _
    $region19: #{tpu_custom_call.1} parent=1 // pred_check_branch
      %286 = sbr.rel (0) target = $region21
    $region20: #{tpu_custom_call.1} parent=1 // pred_region
      %s288 = ssub.s32 576, 576
      %289 = vsyncadd [#allocation4], %s288
      %s290 = sshll.u32 [#allocation5], 4
      %s291 = int_to_ptr.vmem [resolvable:$true] %s290
      %296 = dma.vmem_to_hbm [thread:$0]  %s291, 576, %s3, [#allocation4], 96, 96, 6
    $region21: #{tpu_custom_call.1} parent=1 // pred_fallthru
      _
    // Predicated region
    $region22: #{tpu_custom_call.1} parent=1 // pred_check
      _
    $region23: #{tpu_custom_call.1} parent=1 // pred_check_branch
      %298 = sbr.rel (0) target = $region25
    $region24: #{tpu_custom_call.1} parent=1 // pred_region
      %299 = dma.done [#allocation4], 576
    $region25: #{tpu_custom_call.1} parent=1 // pred_fallthru
      _
    %300 = vsyncpa [#allocation3], 1
    %301 = vsyncpa [#allocation4], 1

</llo_original>
